<compile_context>
chip_gen: v5e
topology: v5e:2x2
jax: 0.10.0
libtpu: 0.0.40
codegen_flags: <defaults>
</compile_context>

<pallas_src>
import functools

import jax
import jax.numpy as jnp
from jax import lax
from jax.experimental import pallas as pl
from jax.experimental.pallas import tpu as pltpu

# ---- model hyper-parameters (from the PyTorch module) ----
HIDDEN_DIM = 32
INPUT_DIM = 1
NUM_LAYERS = 2
OUTPUT_DIM = 1


def _lstm_predictor_kernel(
    x_ref,      # (T, B, 1)     f32   time-major input
    hc0_ref,    # (B, 2H)       f32   [h0_layer0 | h0_layer1]
    cc0_ref,    # (B, 2H)       f32   [c0_layer0 | c0_layer1]
    wih0_ref,   # (1, 8H)       f32   layer-0 W_ih^T, gate-major cols, 0 in layer-1 lanes, f/i/o *0.5
    bias_ref,   # (1, 8H)       f32   [b0 | b1] gate-major, f/i/o *0.5
    wblk_ref,   # (2H, 8H)      bf16/f32  block RHS [[Whh0|Wih1],[0|Whh1]], gate-major, f/i/o *0.5
    wfc_ref,    # (H, O)        f32   fc weight^T
    bfc_ref,    # (1, O)        f32   fc bias
    out_ref,    # (B, O)        f32
    hn_ref,     # (L, B, H)     f32
    cn_ref,     # (L, B, H)     f32
):
  T, B, _ = x_ref.shape
  H = HIDDEN_DIM
  H2 = 2 * H          # combined state width (both layers)
  G = 8 * H           # combined gate width (4 gates x 2 layers)

  # Loop-invariant weights hoisted once (kept weight-stationary across the
  # unrolled recurrence; ~8 vregs for the bf16 RHS, well under regalloc budget).
  wblk = wblk_ref[...]                                  # (2H, 8H)
  bias = bias_ref[...]                                  # (1, 8H)

  # ---- hoisted, off-chain: per-time-step additive pre-activation term -------
  # D_in == 1  =>  x_t @ W_ih0^T is a lane-broadcast outer product; fold the
  # biases of BOTH layers in as well.  (T, B, 8H), computed once.
  add = x_ref[...] * wih0_ref[...].reshape(1, 1, G) + bias.reshape(1, 1, G)

  # Lane masks over the combined (B, 2H) state for the two skew boundaries.
  lane = lax.broadcasted_iota(jnp.int32, (B, H2), 1)
  l0_sel = lane < H                                     # layer-0 half
  l1_sel = lane >= H                                    # layer-1 half

  hcat = hc0_ref[...]                                   # (B, 2H) f32
  ccat = cc0_ref[...]                                   # (B, 2H) f32

  # ---- skew-fused, fully unrolled recurrence ---------------------------------
  # Iteration t: layer-0 cell for time t and layer-1 cell for time t-1, both
  # realized as ONE 64-unit LSTM cell on the combined state.
  for t in range(T + 1):
    # Single MXU push per step (bf16 in, f32 accumulate):
    #   [h0_{t-1} | h1_{t-2}] @ [[Whh0^T  Wih1^T],[0  Whh1^T]]  -> (B, 8H)
    z = jnp.dot(hcat.astype(wblk.dtype), wblk,
                preferred_element_type=jnp.float32)
    gates = z + (add[t] if t < T else bias)             # (B, 8H) f32

    # One EUP push for all gate activations:
    #   sigmoid(x) = 0.5*tanh(x/2) + 0.5, the /2 pre-folded into f/i/o weights.
    tg = jnp.tanh(gates)
    fio = 0.5 * tg[:, 0:3 * H2] + 0.5                   # f, i, o lanes
    f = fio[:, 0 * H2:1 * H2]
    i = fio[:, 1 * H2:2 * H2]
    o = fio[:, 2 * H2:3 * H2]
    g = tg[:, 3 * H2:4 * H2]                            # g lanes stay tanh

    c_new = f * ccat + i * g
    h_new = o * jnp.tanh(c_new)                         # second (last) EUP push

    if t == 0:
      # Layer-1 has no time step yet: keep its half of the state.
      h_new = jnp.where(l0_sel, h_new, hcat)
      c_new = jnp.where(l0_sel, c_new, ccat)
    if t == T:
      # Layer-0 has no time step T: keep its half of the state.
      h_new = jnp.where(l1_sel, h_new, hcat)
      c_new = jnp.where(l1_sel, c_new, ccat)

    hcat, ccat = h_new, c_new

  hn_ref[0] = hcat[:, 0:H]
  hn_ref[1] = hcat[:, H:H2]
  cn_ref[0] = ccat[:, 0:H]
  cn_ref[1] = ccat[:, H:H2]

  # fc head on out[:, -1, :] == final hidden state of the top layer (kept f32).
  out_ref[...] = (
      jnp.dot(hcat[:, H:H2], wfc_ref[...], preferred_element_type=jnp.float32)
      + bfc_ref[...]
  )


# ----------------------------- wrapper ---------------------------------------

def _to_fiog(w):
  """Reorder the last (4H) axis from PyTorch's [i|f|g|o] to [f|i|o|g]."""
  H = HIDDEN_DIM
  return jnp.concatenate(
      [w[..., H:2 * H], w[..., 0:H], w[..., 3 * H:4 * H], w[..., 2 * H:3 * H]],
      axis=-1)


def _interleave_layers(a, b):
  """(.., 4H) layer-0 + (.., 4H) layer-1 (both [f|i|o|g]) -> (.., 8H) where each
  gate's 2H block is [layer0 | layer1] (matches the combined [h0|h1] state)."""
  H = HIDDEN_DIM
  lead = a.shape[:-1]
  stacked = jnp.stack([a.reshape(*lead, 4, H), b.reshape(*lead, 4, H)], axis=-2)
  return stacked.reshape(*lead, 8 * H)


@functools.partial(jax.jit, static_argnames=("matmul_dtype",))
def lstm_predictor_forward(x, h0, c0, params, *, matmul_dtype=jnp.bfloat16):
  """x: (B, T, D_in) batch_first; h0/c0: (L, B, H).  Returns (out, hn, cn)."""
  B, T, D = x.shape
  H, L, O = HIDDEN_DIM, NUM_LAYERS, OUTPUT_DIM
  assert D == INPUT_DIM == 1  # kernel exploits D_in == 1 (outer-product proj)

  (wih0_t, whh0_t, b0, wih1_t, whh1_t, b1, wfc_t, bfc) = params

  x_tmaj = jnp.transpose(x, (1, 0, 2))                       # (T, B, D_in)

  # ---- one-time weight-layout plumbing (tiny; outside the kernel) -----------
  # Block RHS [[Whh0^T | Wih1^T], [0 | Whh1^T]] with gate-major [f|i|o|g]
  # columns, each gate 2H wide laid out [layer0 | layer1].
  zeros_h = jnp.zeros((H, 4 * H), jnp.float32)
  wblk = jnp.concatenate([
      _interleave_layers(_to_fiog(whh0_t), _to_fiog(wih1_t)),   # rows <- h0
      _interleave_layers(zeros_h, _to_fiog(whh1_t)),            # rows <- h1
  ], axis=0)                                                    # (2H, 8H)
  wih0_gm = _interleave_layers(_to_fiog(wih0_t),
                               jnp.zeros((D, 4 * H), jnp.float32))  # (1, 8H)
  bias_gm = _interleave_layers(_to_fiog(b0), _to_fiog(b1))          # (1, 8H)

  # Fold the /2 of sigmoid(x)=0.5*tanh(x/2)+0.5 into the f/i/o columns
  # (lanes [0, 6H)); the g gate (lanes [6H, 8H)) stays unscaled.
  scale = jnp.concatenate([jnp.full((1, 6 * H), 0.5, jnp.float32),
                           jnp.ones((1, 2 * H), jnp.float32)], axis=1)
  wblk = (wblk * scale).astype(matmul_dtype)   # bf16 RHS: single-pass MXU
  wih0_gm = wih0_gm * scale
  bias_gm = bias_gm * scale

  # Combined two-layer state slabs [layer0 | layer1].
  hc0 = jnp.concatenate([h0[0], h0[1]], axis=-1)                # (B, 2H)
  cc0 = jnp.concatenate([c0[0], c0[1]], axis=-1)                # (B, 2H)

  # Advisory cost estimate (latency-bound custom call; helps XLA schedule
  # surrounding ops around it).
  flops = int((T + 1) * 2 * B * (2 * H) * (8 * H)
              + T * B * 8 * H + 2 * B * H * O)
  transcendentals = int((T + 1) * B * (8 * H + 2 * H))
  bytes_accessed = int(
      x_tmaj.size * 4 + 4 * hc0.size * 4 + 4 * cc0.size * 4
      + wih0_gm.size * 4 + bias_gm.size * 4
      + wblk.size * wblk.dtype.itemsize
      + wfc_t.size * 4 + bfc.size * 4 + B * O * 4)

  vmem = pl.BlockSpec(memory_space=pltpu.MemorySpace.VMEM)
  out, hn, cn = pl.pallas_call(
      _lstm_predictor_kernel,
      out_shape=(
          jax.ShapeDtypeStruct((B, OUTPUT_DIM), jnp.float32),
          jax.ShapeDtypeStruct((L, B, H), jnp.float32),
          jax.ShapeDtypeStruct((L, B, H), jnp.float32),
      ),
      in_specs=[vmem] * 8,
      out_specs=(vmem, vmem, vmem),
      cost_estimate=pl.CostEstimate(
          flops=flops,
          transcendentals=transcendentals,
          bytes_accessed=bytes_accessed),
  )(x_tmaj, hc0, cc0, wih0_gm, bias_gm, wblk, wfc_t, bfc)
  return out, hn, cn


# ------------------------- params & reference --------------------------------

def init_params(key):
  """Deterministic init mirroring nn.LSTM / nn.Linear shapes (uniform +-1/sqrt(H))."""
  H, D, O = HIDDEN_DIM, INPUT_DIM, OUTPUT_DIM
  k = 1.0 / jnp.sqrt(jnp.float32(H))
  keys = jax.random.split(key, 10)
  u = lambda kk, shape: jax.random.uniform(kk, shape, jnp.float32, -k, k)

  w_ih0 = u(keys[0], (4 * H, D))
  w_hh0 = u(keys[1], (4 * H, H))
  b_ih0 = u(keys[2], (4 * H,))
  b_hh0 = u(keys[3], (4 * H,))
  w_ih1 = u(keys[4], (4 * H, H))
  w_hh1 = u(keys[5], (4 * H, H))
  b_ih1 = u(keys[6], (4 * H,))
  b_hh1 = u(keys[7], (4 * H,))
  w_fc = u(keys[8], (O, H))
  b_fc = u(keys[9], (O,))

  # "Natural" transposed layout (PyTorch [i|f|g|o] columns, biases folded);
  # the wrapper does the block / gate-major / scaling plumbing.
  params = (
      w_ih0.T,                                  # (D, 4H)
      w_hh0.T,                                  # (H, 4H)
      (b_ih0 + b_hh0).reshape(1, 4 * H),        # (1, 4H)
      w_ih1.T,                                  # (H, 4H)
      w_hh1.T,                                  # (H, 4H)
      (b_ih1 + b_hh1).reshape(1, 4 * H),        # (1, 4H)
      w_fc.T,                                   # (H, O)
      b_fc.reshape(1, O),                       # (1, O)
  )
  return params


def _reference_forward(x, h0, c0, params):
  """Pure-JAX f32 reference (same math as torch.nn.LSTM + Linear)."""
  (wih0_t, whh0_t, b0, wih1_t, whh1_t, b1, wfc_t, bfc) = params
  H = HIDDEN_DIM
  B, T, _ = x.shape

  def run_layer(seq, h, c, wih_t, whh_t, b):
    outs = []
    for t in range(T):
      gates = seq[:, t, :] @ wih_t + h @ whh_t + b
      i = jax.nn.sigmoid(gates[:, 0 * H:1 * H])
      f = jax.nn.sigmoid(gates[:, 1 * H:2 * H])
      g = jnp.tanh(gates[:, 2 * H:3 * H])
      o = jax.nn.sigmoid(gates[:, 3 * H:4 * H])
      c = f * c + i * g
      h = o * jnp.tanh(c)
      outs.append(h)
    return jnp.stack(outs, axis=1), h, c

  seq0, h0n, c0n = run_layer(x, h0[0], c0[0], wih0_t, whh0_t, b0)
  seq1, h1n, c1n = run_layer(seq0, h0[1], c0[1], wih1_t, whh1_t, b1)
  out = seq1[:, -1, :] @ wfc_t + bfc
  hn = jnp.stack([h0n, h1n], axis=0)
  cn = jnp.stack([c0n, c1n], axis=0)
  return out, hn, cn


if __name__ == "__main__":
  key = jax.random.PRNGKey(0)
  k_param, k_x, k_h, k_c = jax.random.split(key, 4)

  B, T = 2, 8
  params = init_params(k_param)
  x = jax.random.normal(k_x, (B, T, INPUT_DIM), jnp.float32)
  h0 = jax.random.normal(k_h, (NUM_LAYERS, B, HIDDEN_DIM), jnp.float32)
  c0 = jax.random.normal(k_c, (NUM_LAYERS, B, HIDDEN_DIM), jnp.float32)

  out_r, hn_r, cn_r = _reference_forward(x, h0, c0, params)

  # 1) Exact-math check: f32 matmul path validates the block-RHS fusion, skew,
  #    gate permutation and the tanh-based sigmoid (few-ulp identity).
  out32, hn32, cn32 = lstm_predictor_forward(
      x, h0, c0, params, matmul_dtype=jnp.float32)
  jax.block_until_ready((out32, hn32, cn32))
  assert jnp.allclose(out32, out_r, rtol=1e-4, atol=1e-4)
  assert jnp.allclose(hn32, hn_r, rtol=1e-4, atol=1e-4)
  assert jnp.allclose(cn32, cn_r, rtol=1e-4, atol=1e-4)

  # 2) Production path: bf16 MXU operands (single-pass MXU), f32 elementwise.
  #    Tolerance loosened for bf16 operand rounding, as flagged in the review.
  out, hn, cn = lstm_predictor_forward(x, h0, c0, params)   # bf16 default
  jax.block_until_ready((out, hn, cn))
  assert out.shape == (B, OUTPUT_DIM)
  assert hn.shape == (NUM_LAYERS, B, HIDDEN_DIM)
  assert cn.shape == (NUM_LAYERS, B, HIDDEN_DIM)
  assert jnp.allclose(out, out_r, rtol=2e-2, atol=2e-2)
  assert jnp.allclose(hn, hn_r, rtol=2e-2, atol=2e-2)
  assert jnp.allclose(cn, cn_r, rtol=2e-2, atol=2e-2)

  print("KERNEL_OK")
</pallas_src>

<mosaic_0001>
module attributes {stable_mosaic.version = 11 : i64} {
  func.func @_lstm_predictor_kernel(%arg0: memref<8x2x1xf32, #tpu.memory_space<vmem>>, %arg1: memref<2x64xf32, #tpu.memory_space<vmem>>, %arg2: memref<2x64xf32, #tpu.memory_space<vmem>>, %arg3: memref<1x256xf32, #tpu.memory_space<vmem>>, %arg4: memref<1x256xf32, #tpu.memory_space<vmem>>, %arg5: memref<64x256xf32, #tpu.memory_space<vmem>>, %arg6: memref<32x1xf32, #tpu.memory_space<vmem>>, %arg7: memref<1x1xf32, #tpu.memory_space<vmem>>, %arg8: memref<2x1xf32, #tpu.memory_space<vmem>>, %arg9: memref<2x2x32xf32, #tpu.memory_space<vmem>>, %arg10: memref<2x2x32xf32, #tpu.memory_space<vmem>>) attributes {dimension_semantics = [], scalar_prefetch = 0 : i64, scratch_operands = 0 : i64, tpu.core_type = #tpu.core_type<tc>} {
    %c0 = arith.constant 0 : index
    %c0_0 = arith.constant 0 : index
    %0 = vector.load %arg5[%c0, %c0_0] : memref<64x256xf32, #tpu.memory_space<vmem>>, vector<64x256xf32>
    %c0_1 = arith.constant 0 : index
    %c0_2 = arith.constant 0 : index
    %1 = vector.load %arg4[%c0_1, %c0_2] : memref<1x256xf32, #tpu.memory_space<vmem>>, vector<1x256xf32>
    %c0_3 = arith.constant 0 : index
    %c0_4 = arith.constant 0 : index
    %c0_5 = arith.constant 0 : index
    %2 = vector.load %arg0[%c0_3, %c0_4, %c0_5] : memref<8x2x1xf32, #tpu.memory_space<vmem>>, vector<8x2x1xf32>
    %c0_6 = arith.constant 0 : index
    %c0_7 = arith.constant 0 : index
    %3 = vector.load %arg3[%c0_6, %c0_7] : memref<1x256xf32, #tpu.memory_space<vmem>>, vector<1x256xf32>
    %4 = vector.shape_cast %3 : vector<1x256xf32> to vector<1x1x256xf32>
    %5 = vector.broadcast %2 : vector<8x2x1xf32> to vector<8x2x256xf32>
    %6 = vector.broadcast %4 : vector<1x1x256xf32> to vector<8x2x256xf32>
    %7 = arith.mulf %5, %6 : vector<8x2x256xf32>
    %8 = vector.shape_cast %1 : vector<1x256xf32> to vector<1x1x256xf32>
    %9 = vector.broadcast %8 : vector<1x1x256xf32> to vector<8x2x256xf32>
    %10 = arith.addf %7, %9 : vector<8x2x256xf32>
    %11 = tpu.iota {dimensions = array<i32: 1>} : vector<2x64xi32>
    %c32_i32 = arith.constant 32 : i32
    %12 = vector.broadcast %c32_i32 : i32 to vector<2x64xi32>
    %13 = arith.cmpi slt, %11, %12 : vector<2x64xi32>
    %c32_i32_8 = arith.constant 32 : i32
    %14 = vector.broadcast %c32_i32_8 : i32 to vector<2x64xi32>
    %15 = arith.cmpi sge, %11, %14 : vector<2x64xi32>
    %c0_9 = arith.constant 0 : index
    %c0_10 = arith.constant 0 : index
    %16 = vector.load %arg1[%c0_9, %c0_10] : memref<2x64xf32, #tpu.memory_space<vmem>>, vector<2x64xf32>
    %c0_11 = arith.constant 0 : index
    %c0_12 = arith.constant 0 : index
    %17 = vector.load %arg2[%c0_11, %c0_12] : memref<2x64xf32, #tpu.memory_space<vmem>>, vector<2x64xf32>
    %cst = arith.constant dense<0.000000e+00> : vector<2x256xf32>
    %18 = tpu.matmul %16, %0, %cst {dimension_numbers = #tpu.dot_dimension_numbers<[1], [0], [0], [1], [0, 0, 1, 1], [], []>} : vector<2x64xf32>, vector<64x256xf32>, vector<2x256xf32> -> vector<2x256xf32>
    %19 = vector.extract_strided_slice %10 {offsets = [0, 0, 0], sizes = [1, 2, 256], strides = [1, 1, 1]} : vector<8x2x256xf32> to vector<1x2x256xf32>
    %20 = vector.shape_cast %19 : vector<1x2x256xf32> to vector<2x256xf32>
    %21 = arith.addf %18, %20 : vector<2x256xf32>
    %22 = math.tanh %21 : vector<2x256xf32>
    %23 = vector.extract_strided_slice %22 {offsets = [0, 0], sizes = [2, 192], strides = [1, 1]} : vector<2x256xf32> to vector<2x192xf32>
    %cst_13 = arith.constant 5.000000e-01 : f32
    %24 = vector.broadcast %cst_13 : f32 to vector<2x192xf32>
    %25 = arith.mulf %24, %23 : vector<2x192xf32>
    %cst_14 = arith.constant 5.000000e-01 : f32
    %26 = vector.broadcast %cst_14 : f32 to vector<2x192xf32>
    %27 = arith.addf %25, %26 : vector<2x192xf32>
    %28 = vector.extract_strided_slice %27 {offsets = [0, 0], sizes = [2, 64], strides = [1, 1]} : vector<2x192xf32> to vector<2x64xf32>
    %29 = vector.extract_strided_slice %27 {offsets = [0, 64], sizes = [2, 64], strides = [1, 1]} : vector<2x192xf32> to vector<2x64xf32>
    %30 = vector.extract_strided_slice %27 {offsets = [0, 128], sizes = [2, 64], strides = [1, 1]} : vector<2x192xf32> to vector<2x64xf32>
    %31 = vector.extract_strided_slice %22 {offsets = [0, 192], sizes = [2, 64], strides = [1, 1]} : vector<2x256xf32> to vector<2x64xf32>
    %32 = arith.mulf %28, %17 : vector<2x64xf32>
    %33 = arith.mulf %29, %31 : vector<2x64xf32>
    %34 = arith.addf %32, %33 : vector<2x64xf32>
    %35 = math.tanh %34 : vector<2x64xf32>
    %36 = arith.mulf %30, %35 : vector<2x64xf32>
    %37 = arith.select %13, %36, %16 : vector<2x64xi1>, vector<2x64xf32>
    %38 = arith.select %13, %34, %17 : vector<2x64xi1>, vector<2x64xf32>
    %cst_15 = arith.constant dense<0.000000e+00> : vector<2x256xf32>
    %39 = tpu.matmul %37, %0, %cst_15 {dimension_numbers = #tpu.dot_dimension_numbers<[1], [0], [0], [1], [0, 0, 1, 1], [], []>} : vector<2x64xf32>, vector<64x256xf32>, vector<2x256xf32> -> vector<2x256xf32>
    %40 = vector.extract_strided_slice %10 {offsets = [1, 0, 0], sizes = [1, 2, 256], strides = [1, 1, 1]} : vector<8x2x256xf32> to vector<1x2x256xf32>
    %41 = vector.shape_cast %40 : vector<1x2x256xf32> to vector<2x256xf32>
    %42 = arith.addf %39, %41 : vector<2x256xf32>
    %43 = math.tanh %42 : vector<2x256xf32>
    %44 = vector.extract_strided_slice %43 {offsets = [0, 0], sizes = [2, 192], strides = [1, 1]} : vector<2x256xf32> to vector<2x192xf32>
    %cst_16 = arith.constant 5.000000e-01 : f32
    %45 = vector.broadcast %cst_16 : f32 to vector<2x192xf32>
    %46 = arith.mulf %45, %44 : vector<2x192xf32>
    %cst_17 = arith.constant 5.000000e-01 : f32
    %47 = vector.broadcast %cst_17 : f32 to vector<2x192xf32>
    %48 = arith.addf %46, %47 : vector<2x192xf32>
    %49 = vector.extract_strided_slice %48 {offsets = [0, 0], sizes = [2, 64], strides = [1, 1]} : vector<2x192xf32> to vector<2x64xf32>
    %50 = vector.extract_strided_slice %48 {offsets = [0, 64], sizes = [2, 64], strides = [1, 1]} : vector<2x192xf32> to vector<2x64xf32>
    %51 = vector.extract_strided_slice %48 {offsets = [0, 128], sizes = [2, 64], strides = [1, 1]} : vector<2x192xf32> to vector<2x64xf32>
    %52 = vector.extract_strided_slice %43 {offsets = [0, 192], sizes = [2, 64], strides = [1, 1]} : vector<2x256xf32> to vector<2x64xf32>
    %53 = arith.mulf %49, %38 : vector<2x64xf32>
    %54 = arith.mulf %50, %52 : vector<2x64xf32>
    %55 = arith.addf %53, %54 : vector<2x64xf32>
    %56 = math.tanh %55 : vector<2x64xf32>
    %57 = arith.mulf %51, %56 : vector<2x64xf32>
    %cst_18 = arith.constant dense<0.000000e+00> : vector<2x256xf32>
    %58 = tpu.matmul %57, %0, %cst_18 {dimension_numbers = #tpu.dot_dimension_numbers<[1], [0], [0], [1], [0, 0, 1, 1], [], []>} : vector<2x64xf32>, vector<64x256xf32>, vector<2x256xf32> -> vector<2x256xf32>
    %59 = vector.extract_strided_slice %10 {offsets = [2, 0, 0], sizes = [1, 2, 256], strides = [1, 1, 1]} : vector<8x2x256xf32> to vector<1x2x256xf32>
    %60 = vector.shape_cast %59 : vector<1x2x256xf32> to vector<2x256xf32>
    %61 = arith.addf %58, %60 : vector<2x256xf32>
    %62 = math.tanh %61 : vector<2x256xf32>
    %63 = vector.extract_strided_slice %62 {offsets = [0, 0], sizes = [2, 192], strides = [1, 1]} : vector<2x256xf32> to vector<2x192xf32>
    %cst_19 = arith.constant 5.000000e-01 : f32
    %64 = vector.broadcast %cst_19 : f32 to vector<2x192xf32>
    %65 = arith.mulf %64, %63 : vector<2x192xf32>
    %cst_20 = arith.constant 5.000000e-01 : f32
    %66 = vector.broadcast %cst_20 : f32 to vector<2x192xf32>
    %67 = arith.addf %65, %66 : vector<2x192xf32>
    %68 = vector.extract_strided_slice %67 {offsets = [0, 0], sizes = [2, 64], strides = [1, 1]} : vector<2x192xf32> to vector<2x64xf32>
    %69 = vector.extract_strided_slice %67 {offsets = [0, 64], sizes = [2, 64], strides = [1, 1]} : vector<2x192xf32> to vector<2x64xf32>
    %70 = vector.extract_strided_slice %67 {offsets = [0, 128], sizes = [2, 64], strides = [1, 1]} : vector<2x192xf32> to vector<2x64xf32>
    %71 = vector.extract_strided_slice %62 {offsets = [0, 192], sizes = [2, 64], strides = [1, 1]} : vector<2x256xf32> to vector<2x64xf32>
    %72 = arith.mulf %68, %55 : vector<2x64xf32>
    %73 = arith.mulf %69, %71 : vector<2x64xf32>
    %74 = arith.addf %72, %73 : vector<2x64xf32>
    %75 = math.tanh %74 : vector<2x64xf32>
    %76 = arith.mulf %70, %75 : vector<2x64xf32>
    %cst_21 = arith.constant dense<0.000000e+00> : vector<2x256xf32>
    %77 = tpu.matmul %76, %0, %cst_21 {dimension_numbers = #tpu.dot_dimension_numbers<[1], [0], [0], [1], [0, 0, 1, 1], [], []>} : vector<2x64xf32>, vector<64x256xf32>, vector<2x256xf32> -> vector<2x256xf32>
    %78 = vector.extract_strided_slice %10 {offsets = [3, 0, 0], sizes = [1, 2, 256], strides = [1, 1, 1]} : vector<8x2x256xf32> to vector<1x2x256xf32>
    %79 = vector.shape_cast %78 : vector<1x2x256xf32> to vector<2x256xf32>
    %80 = arith.addf %77, %79 : vector<2x256xf32>
    %81 = math.tanh %80 : vector<2x256xf32>
    %82 = vector.extract_strided_slice %81 {offsets = [0, 0], sizes = [2, 192], strides = [1, 1]} : vector<2x256xf32> to vector<2x192xf32>
    %cst_22 = arith.constant 5.000000e-01 : f32
    %83 = vector.broadcast %cst_22 : f32 to vector<2x192xf32>
    %84 = arith.mulf %83, %82 : vector<2x192xf32>
    %cst_23 = arith.constant 5.000000e-01 : f32
    %85 = vector.broadcast %cst_23 : f32 to vector<2x192xf32>
    %86 = arith.addf %84, %85 : vector<2x192xf32>
    %87 = vector.extract_strided_slice %86 {offsets = [0, 0], sizes = [2, 64], strides = [1, 1]} : vector<2x192xf32> to vector<2x64xf32>
    %88 = vector.extract_strided_slice %86 {offsets = [0, 64], sizes = [2, 64], strides = [1, 1]} : vector<2x192xf32> to vector<2x64xf32>
    %89 = vector.extract_strided_slice %86 {offsets = [0, 128], sizes = [2, 64], strides = [1, 1]} : vector<2x192xf32> to vector<2x64xf32>
    %90 = vector.extract_strided_slice %81 {offsets = [0, 192], sizes = [2, 64], strides = [1, 1]} : vector<2x256xf32> to vector<2x64xf32>
    %91 = arith.mulf %87, %74 : vector<2x64xf32>
    %92 = arith.mulf %88, %90 : vector<2x64xf32>
    %93 = arith.addf %91, %92 : vector<2x64xf32>
    %94 = math.tanh %93 : vector<2x64xf32>
    %95 = arith.mulf %89, %94 : vector<2x64xf32>
    %cst_24 = arith.constant dense<0.000000e+00> : vector<2x256xf32>
    %96 = tpu.matmul %95, %0, %cst_24 {dimension_numbers = #tpu.dot_dimension_numbers<[1], [0], [0], [1], [0, 0, 1, 1], [], []>} : vector<2x64xf32>, vector<64x256xf32>, vector<2x256xf32> -> vector<2x256xf32>
    %97 = vector.extract_strided_slice %10 {offsets = [4, 0, 0], sizes = [1, 2, 256], strides = [1, 1, 1]} : vector<8x2x256xf32> to vector<1x2x256xf32>
    %98 = vector.shape_cast %97 : vector<1x2x256xf32> to vector<2x256xf32>
    %99 = arith.addf %96, %98 : vector<2x256xf32>
    %100 = math.tanh %99 : vector<2x256xf32>
    %101 = vector.extract_strided_slice %100 {offsets = [0, 0], sizes = [2, 192], strides = [1, 1]} : vector<2x256xf32> to vector<2x192xf32>
    %cst_25 = arith.constant 5.000000e-01 : f32
    %102 = vector.broadcast %cst_25 : f32 to vector<2x192xf32>
    %103 = arith.mulf %102, %101 : vector<2x192xf32>
    %cst_26 = arith.constant 5.000000e-01 : f32
    %104 = vector.broadcast %cst_26 : f32 to vector<2x192xf32>
    %105 = arith.addf %103, %104 : vector<2x192xf32>
    %106 = vector.extract_strided_slice %105 {offsets = [0, 0], sizes = [2, 64], strides = [1, 1]} : vector<2x192xf32> to vector<2x64xf32>
    %107 = vector.extract_strided_slice %105 {offsets = [0, 64], sizes = [2, 64], strides = [1, 1]} : vector<2x192xf32> to vector<2x64xf32>
    %108 = vector.extract_strided_slice %105 {offsets = [0, 128], sizes = [2, 64], strides = [1, 1]} : vector<2x192xf32> to vector<2x64xf32>
    %109 = vector.extract_strided_slice %100 {offsets = [0, 192], sizes = [2, 64], strides = [1, 1]} : vector<2x256xf32> to vector<2x64xf32>
    %110 = arith.mulf %106, %93 : vector<2x64xf32>
    %111 = arith.mulf %107, %109 : vector<2x64xf32>
    %112 = arith.addf %110, %111 : vector<2x64xf32>
    %113 = math.tanh %112 : vector<2x64xf32>
    %114 = arith.mulf %108, %113 : vector<2x64xf32>
    %cst_27 = arith.constant dense<0.000000e+00> : vector<2x256xf32>
    %115 = tpu.matmul %114, %0, %cst_27 {dimension_numbers = #tpu.dot_dimension_numbers<[1], [0], [0], [1], [0, 0, 1, 1], [], []>} : vector<2x64xf32>, vector<64x256xf32>, vector<2x256xf32> -> vector<2x256xf32>
    %116 = vector.extract_strided_slice %10 {offsets = [5, 0, 0], sizes = [1, 2, 256], strides = [1, 1, 1]} : vector<8x2x256xf32> to vector<1x2x256xf32>
    %117 = vector.shape_cast %116 : vector<1x2x256xf32> to vector<2x256xf32>
    %118 = arith.addf %115, %117 : vector<2x256xf32>
    %119 = math.tanh %118 : vector<2x256xf32>
    %120 = vector.extract_strided_slice %119 {offsets = [0, 0], sizes = [2, 192], strides = [1, 1]} : vector<2x256xf32> to vector<2x192xf32>
    %cst_28 = arith.constant 5.000000e-01 : f32
    %121 = vector.broadcast %cst_28 : f32 to vector<2x192xf32>
    %122 = arith.mulf %121, %120 : vector<2x192xf32>
    %cst_29 = arith.constant 5.000000e-01 : f32
    %123 = vector.broadcast %cst_29 : f32 to vector<2x192xf32>
    %124 = arith.addf %122, %123 : vector<2x192xf32>
    %125 = vector.extract_strided_slice %124 {offsets = [0, 0], sizes = [2, 64], strides = [1, 1]} : vector<2x192xf32> to vector<2x64xf32>
    %126 = vector.extract_strided_slice %124 {offsets = [0, 64], sizes = [2, 64], strides = [1, 1]} : vector<2x192xf32> to vector<2x64xf32>
    %127 = vector.extract_strided_slice %124 {offsets = [0, 128], sizes = [2, 64], strides = [1, 1]} : vector<2x192xf32> to vector<2x64xf32>
    %128 = vector.extract_strided_slice %119 {offsets = [0, 192], sizes = [2, 64], strides = [1, 1]} : vector<2x256xf32> to vector<2x64xf32>
    %129 = arith.mulf %125, %112 : vector<2x64xf32>
    %130 = arith.mulf %126, %128 : vector<2x64xf32>
    %131 = arith.addf %129, %130 : vector<2x64xf32>
    %132 = math.tanh %131 : vector<2x64xf32>
    %133 = arith.mulf %127, %132 : vector<2x64xf32>
    %cst_30 = arith.constant dense<0.000000e+00> : vector<2x256xf32>
    %134 = tpu.matmul %133, %0, %cst_30 {dimension_numbers = #tpu.dot_dimension_numbers<[1], [0], [0], [1], [0, 0, 1, 1], [], []>} : vector<2x64xf32>, vector<64x256xf32>, vector<2x256xf32> -> vector<2x256xf32>
    %135 = vector.extract_strided_slice %10 {offsets = [6, 0, 0], sizes = [1, 2, 256], strides = [1, 1, 1]} : vector<8x2x256xf32> to vector<1x2x256xf32>
    %136 = vector.shape_cast %135 : vector<1x2x256xf32> to vector<2x256xf32>
    %137 = arith.addf %134, %136 : vector<2x256xf32>
    %138 = math.tanh %137 : vector<2x256xf32>
    %139 = vector.extract_strided_slice %138 {offsets = [0, 0], sizes = [2, 192], strides = [1, 1]} : vector<2x256xf32> to vector<2x192xf32>
    %cst_31 = arith.constant 5.000000e-01 : f32
    %140 = vector.broadcast %cst_31 : f32 to vector<2x192xf32>
    %141 = arith.mulf %140, %139 : vector<2x192xf32>
    %cst_32 = arith.constant 5.000000e-01 : f32
    %142 = vector.broadcast %cst_32 : f32 to vector<2x192xf32>
    %143 = arith.addf %141, %142 : vector<2x192xf32>
    %144 = vector.extract_strided_slice %143 {offsets = [0, 0], sizes = [2, 64], strides = [1, 1]} : vector<2x192xf32> to vector<2x64xf32>
    %145 = vector.extract_strided_slice %143 {offsets = [0, 64], sizes = [2, 64], strides = [1, 1]} : vector<2x192xf32> to vector<2x64xf32>
    %146 = vector.extract_strided_slice %143 {offsets = [0, 128], sizes = [2, 64], strides = [1, 1]} : vector<2x192xf32> to vector<2x64xf32>
    %147 = vector.extract_strided_slice %138 {offsets = [0, 192], sizes = [2, 64], strides = [1, 1]} : vector<2x256xf32> to vector<2x64xf32>
    %148 = arith.mulf %144, %131 : vector<2x64xf32>
    %149 = arith.mulf %145, %147 : vector<2x64xf32>
    %150 = arith.addf %148, %149 : vector<2x64xf32>
    %151 = math.tanh %150 : vector<2x64xf32>
    %152 = arith.mulf %146, %151 : vector<2x64xf32>
    %cst_33 = arith.constant dense<0.000000e+00> : vector<2x256xf32>
    %153 = tpu.matmul %152, %0, %cst_33 {dimension_numbers = #tpu.dot_dimension_numbers<[1], [0], [0], [1], [0, 0, 1, 1], [], []>} : vector<2x64xf32>, vector<64x256xf32>, vector<2x256xf32> -> vector<2x256xf32>
    %154 = vector.extract_strided_slice %10 {offsets = [7, 0, 0], sizes = [1, 2, 256], strides = [1, 1, 1]} : vector<8x2x256xf32> to vector<1x2x256xf32>
    %155 = vector.shape_cast %154 : vector<1x2x256xf32> to vector<2x256xf32>
    %156 = arith.addf %153, %155 : vector<2x256xf32>
    %157 = math.tanh %156 : vector<2x256xf32>
    %158 = vector.extract_strided_slice %157 {offsets = [0, 0], sizes = [2, 192], strides = [1, 1]} : vector<2x256xf32> to vector<2x192xf32>
    %cst_34 = arith.constant 5.000000e-01 : f32
    %159 = vector.broadcast %cst_34 : f32 to vector<2x192xf32>
    %160 = arith.mulf %159, %158 : vector<2x192xf32>
    %cst_35 = arith.constant 5.000000e-01 : f32
    %161 = vector.broadcast %cst_35 : f32 to vector<2x192xf32>
    %162 = arith.addf %160, %161 : vector<2x192xf32>
    %163 = vector.extract_strided_slice %162 {offsets = [0, 0], sizes = [2, 64], strides = [1, 1]} : vector<2x192xf32> to vector<2x64xf32>
    %164 = vector.extract_strided_slice %162 {offsets = [0, 64], sizes = [2, 64], strides = [1, 1]} : vector<2x192xf32> to vector<2x64xf32>
    %165 = vector.extract_strided_slice %162 {offsets = [0, 128], sizes = [2, 64], strides = [1, 1]} : vector<2x192xf32> to vector<2x64xf32>
    %166 = vector.extract_strided_slice %157 {offsets = [0, 192], sizes = [2, 64], strides = [1, 1]} : vector<2x256xf32> to vector<2x64xf32>
    %167 = arith.mulf %163, %150 : vector<2x64xf32>
    %168 = arith.mulf %164, %166 : vector<2x64xf32>
    %169 = arith.addf %167, %168 : vector<2x64xf32>
    %170 = math.tanh %169 : vector<2x64xf32>
    %171 = arith.mulf %165, %170 : vector<2x64xf32>
    %cst_36 = arith.constant dense<0.000000e+00> : vector<2x256xf32>
    %172 = tpu.matmul %171, %0, %cst_36 {dimension_numbers = #tpu.dot_dimension_numbers<[1], [0], [0], [1], [0, 0, 1, 1], [], []>} : vector<2x64xf32>, vector<64x256xf32>, vector<2x256xf32> -> vector<2x256xf32>
    %173 = vector.broadcast %1 : vector<1x256xf32> to vector<2x256xf32>
    %174 = arith.addf %172, %173 : vector<2x256xf32>
    %175 = math.tanh %174 : vector<2x256xf32>
    %176 = vector.extract_strided_slice %175 {offsets = [0, 0], sizes = [2, 192], strides = [1, 1]} : vector<2x256xf32> to vector<2x192xf32>
    %cst_37 = arith.constant 5.000000e-01 : f32
    %177 = vector.broadcast %cst_37 : f32 to vector<2x192xf32>
    %178 = arith.mulf %177, %176 : vector<2x192xf32>
    %cst_38 = arith.constant 5.000000e-01 : f32
    %179 = vector.broadcast %cst_38 : f32 to vector<2x192xf32>
    %180 = arith.addf %178, %179 : vector<2x192xf32>
    %181 = vector.extract_strided_slice %180 {offsets = [0, 0], sizes = [2, 64], strides = [1, 1]} : vector<2x192xf32> to vector<2x64xf32>
    %182 = vector.extract_strided_slice %180 {offsets = [0, 64], sizes = [2, 64], strides = [1, 1]} : vector<2x192xf32> to vector<2x64xf32>
    %183 = vector.extract_strided_slice %180 {offsets = [0, 128], sizes = [2, 64], strides = [1, 1]} : vector<2x192xf32> to vector<2x64xf32>
    %184 = vector.extract_strided_slice %175 {offsets = [0, 192], sizes = [2, 64], strides = [1, 1]} : vector<2x256xf32> to vector<2x64xf32>
    %185 = arith.mulf %181, %169 : vector<2x64xf32>
    %186 = arith.mulf %182, %184 : vector<2x64xf32>
    %187 = arith.addf %185, %186 : vector<2x64xf32>
    %188 = math.tanh %187 : vector<2x64xf32>
    %189 = arith.mulf %183, %188 : vector<2x64xf32>
    %190 = arith.select %15, %189, %171 : vector<2x64xi1>, vector<2x64xf32>
    %191 = arith.select %15, %187, %169 : vector<2x64xi1>, vector<2x64xf32>
    %192 = vector.extract_strided_slice %190 {offsets = [0, 0], sizes = [2, 32], strides = [1, 1]} : vector<2x64xf32> to vector<2x32xf32>
    %c0_39 = arith.constant 0 : index
    %c0_40 = arith.constant 0 : index
    %c0_41 = arith.constant 0 : index
    %193 = vector.load %arg9[%c0_39, %c0_40, %c0_41] : memref<2x2x32xf32, #tpu.memory_space<vmem>>, vector<1x2x32xf32>
    %194 = vector.shape_cast %193 : vector<1x2x32xf32> to vector<2x32xf32>
    %195 = vector.shape_cast %192 : vector<2x32xf32> to vector<1x2x32xf32>
    tpu.vector_store %arg9[%c0_39, %c0_40, %c0_41], %195 {strides = array<i32>} : memref<2x2x32xf32, #tpu.memory_space<vmem>>, vector<1x2x32xf32>,
    %196 = vector.extract_strided_slice %190 {offsets = [0, 32], sizes = [2, 32], strides = [1, 1]} : vector<2x64xf32> to vector<2x32xf32>
    %c1 = arith.constant 1 : index
    %c0_42 = arith.constant 0 : index
    %c0_43 = arith.constant 0 : index
    %197 = vector.load %arg9[%c1, %c0_42, %c0_43] : memref<2x2x32xf32, #tpu.memory_space<vmem>>, vector<1x2x32xf32>
    %198 = vector.shape_cast %197 : vector<1x2x32xf32> to vector<2x32xf32>
    %199 = vector.shape_cast %196 : vector<2x32xf32> to vector<1x2x32xf32>
    tpu.vector_store %arg9[%c1, %c0_42, %c0_43], %199 {strides = array<i32>} : memref<2x2x32xf32, #tpu.memory_space<vmem>>, vector<1x2x32xf32>,
    %200 = vector.extract_strided_slice %191 {offsets = [0, 0], sizes = [2, 32], strides = [1, 1]} : vector<2x64xf32> to vector<2x32xf32>
    %c0_44 = arith.constant 0 : index
    %c0_45 = arith.constant 0 : index
    %c0_46 = arith.constant 0 : index
    %201 = vector.load %arg10[%c0_44, %c0_45, %c0_46] : memref<2x2x32xf32, #tpu.memory_space<vmem>>, vector<1x2x32xf32>
    %202 = vector.shape_cast %201 : vector<1x2x32xf32> to vector<2x32xf32>
    %203 = vector.shape_cast %200 : vector<2x32xf32> to vector<1x2x32xf32>
    tpu.vector_store %arg10[%c0_44, %c0_45, %c0_46], %203 {strides = array<i32>} : memref<2x2x32xf32, #tpu.memory_space<vmem>>, vector<1x2x32xf32>,
    %204 = vector.extract_strided_slice %191 {offsets = [0, 32], sizes = [2, 32], strides = [1, 1]} : vector<2x64xf32> to vector<2x32xf32>
    %c1_47 = arith.constant 1 : index
    %c0_48 = arith.constant 0 : index
    %c0_49 = arith.constant 0 : index
    %205 = vector.load %arg10[%c1_47, %c0_48, %c0_49] : memref<2x2x32xf32, #tpu.memory_space<vmem>>, vector<1x2x32xf32>
    %206 = vector.shape_cast %205 : vector<1x2x32xf32> to vector<2x32xf32>
    %207 = vector.shape_cast %204 : vector<2x32xf32> to vector<1x2x32xf32>
    tpu.vector_store %arg10[%c1_47, %c0_48, %c0_49], %207 {strides = array<i32>} : memref<2x2x32xf32, #tpu.memory_space<vmem>>, vector<1x2x32xf32>,
    %208 = vector.extract_strided_slice %190 {offsets = [0, 32], sizes = [2, 32], strides = [1, 1]} : vector<2x64xf32> to vector<2x32xf32>
    %c0_50 = arith.constant 0 : index
    %c0_51 = arith.constant 0 : index
    %209 = vector.load %arg6[%c0_50, %c0_51] : memref<32x1xf32, #tpu.memory_space<vmem>>, vector<32x1xf32>
    %cst_52 = arith.constant dense<0.000000e+00> : vector<2x1xf32>
    %210 = tpu.matmul %208, %209, %cst_52 {dimension_numbers = #tpu.dot_dimension_numbers<[1], [0], [0], [1], [0, 0, 1, 1], [], []>} : vector<2x32xf32>, vector<32x1xf32>, vector<2x1xf32> -> vector<2x1xf32>
    %c0_53 = arith.constant 0 : index
    %c0_54 = arith.constant 0 : index
    %211 = vector.load %arg7[%c0_53, %c0_54] : memref<1x1xf32, #tpu.memory_space<vmem>>, vector<1x1xf32>
    %212 = vector.broadcast %211 : vector<1x1xf32> to vector<2x1xf32>
    %213 = arith.addf %210, %212 : vector<2x1xf32>
    %c0_55 = arith.constant 0 : index
    %c0_56 = arith.constant 0 : index
    %214 = vector.load %arg8[%c0_55, %c0_56] : memref<2x1xf32, #tpu.memory_space<vmem>>, vector<2x1xf32>
    tpu.vector_store %arg8[%c0_55, %c0_56], %213 {strides = array<i32>} : memref<2x1xf32, #tpu.memory_space<vmem>>, vector<2x1xf32>,
    return
  }
}

</mosaic_0001>

<llo_original>
// kernel: lstm_predictor_forward.1
$region0: #{lstm_predictor_forward.1}
  #allocation0 [shape = 'u32[]', space=smem, size = 0x4, offset = 0x4, fixed_abs, tag = 'smem constant byte address 0x4 - core index']
  #allocation1 [shape = 'u32[72,128]{1,0:T(1,128)}', space=vmem, size = 0x9000, scoped, tag = 'internal scratch']
  #allocation2 [shape = 'f32[1,1]{1,0:T(1,128)S(1)}', space=vmem, size = 0x200, scoped, tag = 'scoped memory for lstm_predictor_forward.1']
  %s0 = inlined_call_operand.vmem [shape: f32[8,2,1], index: 0, kind: input, shape index: {}]
  %s1 = inlined_call_operand.vmem [shape: f32[2,64], index: 1, kind: input, shape index: {}]
  %s2 = inlined_call_operand.vmem [shape: f32[2,64], index: 2, kind: input, shape index: {}]
  %s3 = inlined_call_operand.vmem [shape: f32[1,256], index: 3, kind: input, shape index: {}]
  %s4 = inlined_call_operand.vmem [shape: f32[1,256], index: 4, kind: input, shape index: {}]
  %s5 = inlined_call_operand.vmem [shape: f32[64,256], index: 5, kind: input, shape index: {}]
  %s6 = inlined_call_operand.vmem [shape: f32[32,1], index: 6, kind: input, shape index: {}]
  %s7 = inlined_call_operand.<no memory space> [shape: f32[1,1], index: 7, kind: input, shape index: {}]
  %s8 = inlined_call_operand.vmem [shape: f32[2,1], index: 8, kind: output, shape index: {0}]
  %s9 = inlined_call_operand.hbm [shape: f32[2,2,32], index: 9, kind: output, shape index: {1}]
  %s10 = inlined_call_operand.hbm [shape: f32[2,2,32], index: 10, kind: output, shape index: {2}]
  %11 = xla_tuple %s8, %s9, %s10
  %s12 = sld [smem:[#allocation0]]
  $region58: #{lstm_predictor_forward.1} parent=0
    _
  %s14 = ssub.s32 1, %s12
  %s15 = scalar_select 0, %s14, %s12
  %v16 = vstv %s7
  %17 = vst [vmem:[#allocation2] sm:$0x1] %v16
  $region1: #{lstm_predictor_forward.1} parent=0
    #allocation3 [shape = 'u8[2048]{0}', space=vmem, size = 0x800, scoped, tag = 'output window, operand 1, single buffered']
    #allocation4 [shape = 's32[1]{0}', space=sflag, size = 0x4, scoped, tag = 'scoped memory for lstm_predictor_forward.1']
    #allocation5 [shape = 'u8[2048]{0}', space=vmem, size = 0x800, scoped, tag = 'output window, operand 2, single buffered']
    #allocation6 [shape = 's32[1]{0}', space=sflag, size = 0x4, scoped, tag = 'scoped memory for lstm_predictor_forward.1']
    %18 = vsyncpa [#allocation4], 0
    %19 = vsyncpa [#allocation6], 0
    // Predicated region
    $region2: #{lstm_predictor_forward.1} parent=1 // pred_check
      _
    $region3: #{lstm_predictor_forward.1} parent=1 // pred_check_branch
      %21 = sbr.rel (0) target = $region5
    $region4: #{lstm_predictor_forward.1} parent=1 // pred_region
      _
    $region5: #{lstm_predictor_forward.1} parent=1 // pred_fallthru
      _
    // Predicated region
    $region6: #{lstm_predictor_forward.1} parent=1 // pred_check
      _
    $region7: #{lstm_predictor_forward.1} parent=1 // pred_check_branch
      %23 = sbr.rel (0) target = $region9
    $region8: #{lstm_predictor_forward.1} parent=1 // pred_region
      _
    $region9: #{lstm_predictor_forward.1} parent=1 // pred_fallthru
      _
    // Predicated region
    $region10: #{lstm_predictor_forward.1} parent=1 // pred_check
      _
    $region11: #{lstm_predictor_forward.1} parent=1 // pred_check_branch
      %25 = sbr.rel (0) target = $region13
    $region12: #{lstm_predictor_forward.1} parent=1 // pred_region
      _
    $region13: #{lstm_predictor_forward.1} parent=1 // pred_fallthru
      _
    // Predicated region
    $region14: #{lstm_predictor_forward.1} parent=1 // pred_check
      _
    $region15: #{lstm_predictor_forward.1} parent=1 // pred_check_branch
      %27 = sbr.rel (0) target = $region17
    $region16: #{lstm_predictor_forward.1} parent=1 // pred_region
      _
    $region17: #{lstm_predictor_forward.1} parent=1 // pred_fallthru
      _
    // Predicated region
    $region18: #{lstm_predictor_forward.1} parent=1 // pred_check
      _
    $region19: #{lstm_predictor_forward.1} parent=1 // pred_check_branch
      %29 = sbr.rel (0) target = $region21
    $region20: #{lstm_predictor_forward.1} parent=1 // pred_region
      _
    $region21: #{lstm_predictor_forward.1} parent=1 // pred_fallthru
      _
    // Predicated region
    $region22: #{lstm_predictor_forward.1} parent=1 // pred_check
      _
    $region23: #{lstm_predictor_forward.1} parent=1 // pred_check_branch
      %31 = sbr.rel (0) target = $region25
    $region24: #{lstm_predictor_forward.1} parent=1 // pred_region
      _
    $region25: #{lstm_predictor_forward.1} parent=1 // pred_fallthru
      _
    // Predicated region
    $region26: #{lstm_predictor_forward.1} parent=1 // pred_check
      _
    $region27: #{lstm_predictor_forward.1} parent=1 // pred_check_branch
      %33 = sbr.rel (0) target = $region29
    $region28: #{lstm_predictor_forward.1} parent=1 // pred_region
      _
    $region29: #{lstm_predictor_forward.1} parent=1 // pred_fallthru
      _
    // Predicated region
    $region30: #{lstm_predictor_forward.1} parent=1 // pred_check
      _
    $region31: #{lstm_predictor_forward.1} parent=1 // pred_check_branch
      %35 = sbr.rel (0) target = $region33
    $region32: #{lstm_predictor_forward.1} parent=1 // pred_region
      _
    $region33: #{lstm_predictor_forward.1} parent=1 // pred_fallthru
      _
    %v36 = vld [vmem:[%s5] sm:$0xff]
    %v37 = vld [vmem:[%s5 + $0x8] sm:$0xff]
    %v38 = vld [vmem:[%s5 + $0x10] sm:$0xff]
    %v39 = vld [vmem:[%s5 + $0x18] sm:$0xff]
    %v40 = vld [vmem:[%s5 + $0x20] sm:$0xff]
    %v41 = vld [vmem:[%s5 + $0x28] sm:$0xff]
    %v42 = vld [vmem:[%s5 + $0x30] sm:$0xff]
    %v43 = vld [vmem:[%s5 + $0x38] sm:$0xff]
    %v44 = vld [vmem:[%s5 + $0x40] sm:$0xff]
    %v45 = vld [vmem:[%s5 + $0x48] sm:$0xff]
    %v46 = vld [vmem:[%s5 + $0x50] sm:$0xff]
    %v47 = vld [vmem:[%s5 + $0x58] sm:$0xff]
    %v48 = vld [vmem:[%s5 + $0x60] sm:$0xff]
    %v49 = vld [vmem:[%s5 + $0x68] sm:$0xff]
    %v50 = vld [vmem:[%s5 + $0x70] sm:$0xff]
    %v51 = vld [vmem:[%s5 + $0x78] sm:$0xff]
    %v52 = vld [vmem:[%s4] sm:$0x3]
    %v53 = vld [vmem:[%s0] sm:$0x3]
    %v54 = vld [vmem:[%s0 + $0x2] sm:$0x3]
    %v55 = vld [vmem:[%s0 + $0x4] sm:$0x3]
    %v56 = vld [vmem:[%s0 + $0x6] sm:$0x3]
    %v57 = vld [vmem:[%s0 + $0x8] sm:$0x3]
    %v58 = vld [vmem:[%s0 + $0xa] sm:$0x3]
    %v59 = vld [vmem:[%s0 + $0xc] sm:$0x3]
    %v60 = vld [vmem:[%s0 + $0xe] sm:$0x3]
    %v61 = vld [vmem:[%s3] sm:$0x3]
    %63 = vset.pattern.permute.xlu0 0
    %64 = vperm.xlu0 %63, %v53
    %v65 = vpop.permute.xlu0 %64
    %68 = vset.pattern.permute.xlu0 0
    %69 = vperm.xlu0 %68, %v54
    %v70 = vpop.permute.xlu0 %69
    %73 = vset.pattern.permute.xlu0 0
    %74 = vperm.xlu0 %73, %v55
    %v75 = vpop.permute.xlu0 %74
    %78 = vset.pattern.permute.xlu0 0
    %79 = vperm.xlu0 %78, %v56
    %v80 = vpop.permute.xlu0 %79
    %83 = vset.pattern.permute.xlu0 0
    %84 = vperm.xlu0 %83, %v57
    %v85 = vpop.permute.xlu0 %84
    %88 = vset.pattern.permute.xlu0 0
    %89 = vperm.xlu0 %88, %v58
    %v90 = vpop.permute.xlu0 %89
    %93 = vset.pattern.permute.xlu0 0
    %94 = vperm.xlu0 %93, %v59
    %v95 = vpop.permute.xlu0 %94
    %98 = vset.pattern.permute.xlu0 0
    %99 = vperm.xlu0 %98, %v60
    %v100 = vpop.permute.xlu0 %99
    %v103 = vperm.slane %v61, 0
    %v104 = vperm.slane %v61, 1
    %v107 = vmul.f32 %v65, %v103
    %v108 = vmul.f32 %v65, %v104
    %v109 = vmul.f32 %v70, %v103
    %v110 = vmul.f32 %v70, %v104
    %v111 = vmul.f32 %v75, %v103
    %v112 = vmul.f32 %v75, %v104
    %v113 = vmul.f32 %v80, %v103
    %v114 = vmul.f32 %v80, %v104
    %v115 = vmul.f32 %v85, %v103
    %v116 = vmul.f32 %v85, %v104
    %v117 = vmul.f32 %v90, %v103
    %v118 = vmul.f32 %v90, %v104
    %v119 = vmul.f32 %v95, %v103
    %v120 = vmul.f32 %v95, %v104
    %v121 = vmul.f32 %v100, %v103
    %v122 = vmul.f32 %v100, %v104
    %v124 = vperm.slane %v52, 0
    %v125 = vperm.slane %v52, 1
    %v128 = vadd.f32 %v107, %v124
    %v129 = vadd.f32 %v108, %v125
    %v130 = vadd.f32 %v109, %v124
    %v131 = vadd.f32 %v110, %v125
    %v132 = vadd.f32 %v111, %v124
    %v133 = vadd.f32 %v112, %v125
    %v134 = vadd.f32 %v113, %v124
    %v135 = vadd.f32 %v114, %v125
    %v136 = vadd.f32 %v115, %v124
    %v137 = vadd.f32 %v116, %v125
    %v138 = vadd.f32 %v117, %v124
    %v139 = vadd.f32 %v118, %v125
    %v140 = vadd.f32 %v119, %v124
    %v141 = vadd.f32 %v120, %v125
    %v142 = vadd.f32 %v121, %v124
    %v143 = vadd.f32 %v122, %v125
    %v144 = vlaneseq
    %v145 = vand.u32 %v144, 127
    %vm146 = vcmp.lt.s32.totalorder %v145, 32
    %vm147 = vcmp.ge.s32.totalorder %v145, 32
    %v148 = vld [vmem:[%s1] sm:$0x3]
    %v149 = vld [vmem:[%s2] sm:$0x3]
    %vm150 = vcmask 523264
    %v152 = vsel %vm150, %v148, 0
    %154 = vmatpush.msra.mxu0 0.0
    %155 = vmatpush.msra.mxu0 0.0
    %156 = vmatpush.msra.mxu0 0.0
    %157 = vmatpush.msra.mxu0 0.0
    %158 = vmatpush.msra.mxu0 0.0
    %159 = vmatpush.msra.mxu0 0.0
    %160 = vmatpush.msra.mxu0 0.0
    %161 = vmatpush.msra.mxu0 0.0
    %162 = vmatpush.msra.mxu0 %v50
    %163 = vmatpush.msra.mxu0 %v48
    %164 = vmatpush.msra.mxu0 %v46
    %165 = vmatpush.msra.mxu0 %v44
    %166 = vmatpush.msra.mxu0 %v42
    %167 = vmatpush.msra.mxu0 %v40
    %168 = vmatpush.msra.mxu0 %v38
    %169 = vmatpush.msra.mxu0 %v36
    %170 = vmatmul.f32.gmra.mxu0 %v152
    %v171 = vpop.f32.mrf.mxu0
    %v172 = vadd.f32 %v128, %v171
    %173 = vdwg.mxu0
    %174 = vmatpush.msra.mxu0 0.0
    %175 = vmatpush.msra.mxu0 0.0
    %176 = vmatpush.msra.mxu0 0.0
    %177 = vmatpush.msra.mxu0 0.0
    %178 = vmatpush.msra.mxu0 0.0
    %179 = vmatpush.msra.mxu0 0.0
    %180 = vmatpush.msra.mxu0 0.0
    %181 = vmatpush.msra.mxu0 0.0
    %182 = vmatpush.msra.mxu0 %v51
    %183 = vmatpush.msra.mxu0 %v49
    %184 = vmatpush.msra.mxu0 %v47
    %185 = vmatpush.msra.mxu0 %v45
    %186 = vmatpush.msra.mxu0 %v43
    %187 = vmatpush.msra.mxu0 %v41
    %188 = vmatpush.msra.mxu0 %v39
    %189 = vmatpush.msra.mxu0 %v37
    %190 = vmatmul.f32.gmra.mxu0 %v152
    %v191 = vpop.f32.mrf.mxu0
    %v192 = vadd.f32 %v129, %v191
    %193 = vdwg.mxu0
    %v194 = vtanh.pop %v172
    %v195 = vtanh.pop %v192
    %v196 = vmul.f32 %v194, 0.5
    %v197 = vmul.f32 %v195, 0.5
    %v198 = vadd.f32 %v196, 0.5
    %v199 = vadd.f32 %v197, 0.5
    %v200 = vmul.f32 %v198, %v149
    %v201 = vmul.f32 %v198, %v195
    %203 = vrot.lane.b32.xlu0 %v201, 64
    %v204 = vpop.permute.xlu0 %203
    %v206 = vadd.f32 %v200, %v204
    %v207 = vtanh.pop %v206
    %v208 = vmul.f32 %v199, %v207
    %v209 = vsel %vm146, %v208, %v148
    %v210 = vsel %vm146, %v206, %v149
    %v212 = vsel %vm150, %v209, 0
    %214 = vmatpush.msra.mxu0 0.0
    %215 = vmatpush.msra.mxu0 0.0
    %216 = vmatpush.msra.mxu0 0.0
    %217 = vmatpush.msra.mxu0 0.0
    %218 = vmatpush.msra.mxu0 0.0
    %219 = vmatpush.msra.mxu0 0.0
    %220 = vmatpush.msra.mxu0 0.0
    %221 = vmatpush.msra.mxu0 0.0
    %222 = vmatpush.msra.mxu0 %v50
    %223 = vmatpush.msra.mxu0 %v48
    %224 = vmatpush.msra.mxu0 %v46
    %225 = vmatpush.msra.mxu0 %v44
    %226 = vmatpush.msra.mxu0 %v42
    %227 = vmatpush.msra.mxu0 %v40
    %228 = vmatpush.msra.mxu0 %v38
    %229 = vmatpush.msra.mxu0 %v36
    %230 = vmatmul.f32.gmra.mxu0 %v212
    %v231 = vpop.f32.mrf.mxu0
    %v232 = vadd.f32 %v130, %v231
    %233 = vdwg.mxu0
    %234 = vmatpush.msra.mxu0 0.0
    %235 = vmatpush.msra.mxu0 0.0
    %236 = vmatpush.msra.mxu0 0.0
    %237 = vmatpush.msra.mxu0 0.0
    %238 = vmatpush.msra.mxu0 0.0
    %239 = vmatpush.msra.mxu0 0.0
    %240 = vmatpush.msra.mxu0 0.0
    %241 = vmatpush.msra.mxu0 0.0
    %242 = vmatpush.msra.mxu0 %v51
    %243 = vmatpush.msra.mxu0 %v49
    %244 = vmatpush.msra.mxu0 %v47
    %245 = vmatpush.msra.mxu0 %v45
    %246 = vmatpush.msra.mxu0 %v43
    %247 = vmatpush.msra.mxu0 %v41
    %248 = vmatpush.msra.mxu0 %v39
    %249 = vmatpush.msra.mxu0 %v37
    %250 = vmatmul.f32.gmra.mxu0 %v212
    %v251 = vpop.f32.mrf.mxu0
    %v252 = vadd.f32 %v131, %v251
    %253 = vdwg.mxu0
    %v254 = vtanh.pop %v232
    %v255 = vtanh.pop %v252
    %v256 = vmul.f32 %v254, 0.5
    %v257 = vmul.f32 %v255, 0.5
    %v258 = vadd.f32 %v256, 0.5
    %v259 = vadd.f32 %v257, 0.5
    %v260 = vmul.f32 %v258, %v210
    %v261 = vmul.f32 %v258, %v255
    %263 = vrot.lane.b32.xlu0 %v261, 64
    %v264 = vpop.permute.xlu0 %263
    %v266 = vadd.f32 %v260, %v264
    %v267 = vtanh.pop %v266
    %v268 = vmul.f32 %v259, %v267
    %v270 = vsel %vm150, %v268, 0
    %272 = vmatpush.msra.mxu0 0.0
    %273 = vmatpush.msra.mxu0 0.0
    %274 = vmatpush.msra.mxu0 0.0
    %275 = vmatpush.msra.mxu0 0.0
    %276 = vmatpush.msra.mxu0 0.0
    %277 = vmatpush.msra.mxu0 0.0
    %278 = vmatpush.msra.mxu0 0.0
    %279 = vmatpush.msra.mxu0 0.0
    %280 = vmatpush.msra.mxu0 %v50
    %281 = vmatpush.msra.mxu0 %v48
    %282 = vmatpush.msra.mxu0 %v46
    %283 = vmatpush.msra.mxu0 %v44
    %284 = vmatpush.msra.mxu0 %v42
    %285 = vmatpush.msra.mxu0 %v40
    %286 = vmatpush.msra.mxu0 %v38
    %287 = vmatpush.msra.mxu0 %v36
    %288 = vmatmul.f32.gmra.mxu0 %v270
    %v289 = vpop.f32.mrf.mxu0
    %v290 = vadd.f32 %v132, %v289
    %291 = vdwg.mxu0
    %292 = vmatpush.msra.mxu0 0.0
    %293 = vmatpush.msra.mxu0 0.0
    %294 = vmatpush.msra.mxu0 0.0
    %295 = vmatpush.msra.mxu0 0.0
    %296 = vmatpush.msra.mxu0 0.0
    %297 = vmatpush.msra.mxu0 0.0
    %298 = vmatpush.msra.mxu0 0.0
    %299 = vmatpush.msra.mxu0 0.0
    %300 = vmatpush.msra.mxu0 %v51
    %301 = vmatpush.msra.mxu0 %v49
    %302 = vmatpush.msra.mxu0 %v47
    %303 = vmatpush.msra.mxu0 %v45
    %304 = vmatpush.msra.mxu0 %v43
    %305 = vmatpush.msra.mxu0 %v41
    %306 = vmatpush.msra.mxu0 %v39
    %307 = vmatpush.msra.mxu0 %v37
    %308 = vmatmul.f32.gmra.mxu0 %v270
    %v309 = vpop.f32.mrf.mxu0
    %v310 = vadd.f32 %v133, %v309
    %311 = vdwg.mxu0
    %v312 = vtanh.pop %v290
    %v313 = vtanh.pop %v310
    %v314 = vmul.f32 %v312, 0.5
    %v315 = vmul.f32 %v313, 0.5
    %v316 = vadd.f32 %v314, 0.5
    %v317 = vadd.f32 %v315, 0.5
    %v318 = vmul.f32 %v316, %v266
    %v319 = vmul.f32 %v316, %v313
    %321 = vrot.lane.b32.xlu0 %v319, 64
    %v322 = vpop.permute.xlu0 %321
    %v324 = vadd.f32 %v318, %v322
    %v325 = vtanh.pop %v324
    %v326 = vmul.f32 %v317, %v325
    %v328 = vsel %vm150, %v326, 0
    %330 = vmatpush.msra.mxu0 0.0
    %331 = vmatpush.msra.mxu0 0.0
    %332 = vmatpush.msra.mxu0 0.0
    %333 = vmatpush.msra.mxu0 0.0
    %334 = vmatpush.msra.mxu0 0.0
    %335 = vmatpush.msra.mxu0 0.0
    %336 = vmatpush.msra.mxu0 0.0
    %337 = vmatpush.msra.mxu0 0.0
    %338 = vmatpush.msra.mxu0 %v50
    %339 = vmatpush.msra.mxu0 %v48
    %340 = vmatpush.msra.mxu0 %v46
    %341 = vmatpush.msra.mxu0 %v44
    %342 = vmatpush.msra.mxu0 %v42
    %343 = vmatpush.msra.mxu0 %v40
    %344 = vmatpush.msra.mxu0 %v38
    %345 = vmatpush.msra.mxu0 %v36
    %346 = vmatmul.f32.gmra.mxu0 %v328
    %v347 = vpop.f32.mrf.mxu0
    %v348 = vadd.f32 %v134, %v347
    %349 = vdwg.mxu0
    %350 = vmatpush.msra.mxu0 0.0
    %351 = vmatpush.msra.mxu0 0.0
    %352 = vmatpush.msra.mxu0 0.0
    %353 = vmatpush.msra.mxu0 0.0
    %354 = vmatpush.msra.mxu0 0.0
    %355 = vmatpush.msra.mxu0 0.0
    %356 = vmatpush.msra.mxu0 0.0
    %357 = vmatpush.msra.mxu0 0.0
    %358 = vmatpush.msra.mxu0 %v51
    %359 = vmatpush.msra.mxu0 %v49
    %360 = vmatpush.msra.mxu0 %v47
    %361 = vmatpush.msra.mxu0 %v45
    %362 = vmatpush.msra.mxu0 %v43
    %363 = vmatpush.msra.mxu0 %v41
    %364 = vmatpush.msra.mxu0 %v39
    %365 = vmatpush.msra.mxu0 %v37
    %366 = vmatmul.f32.gmra.mxu0 %v328
    %v367 = vpop.f32.mrf.mxu0
    %v368 = vadd.f32 %v135, %v367
    %369 = vdwg.mxu0
    %v370 = vtanh.pop %v348
    %v371 = vtanh.pop %v368
    %v372 = vmul.f32 %v370, 0.5
    %v373 = vmul.f32 %v371, 0.5
    %v374 = vadd.f32 %v372, 0.5
    %v375 = vadd.f32 %v373, 0.5
    %v376 = vmul.f32 %v374, %v324
    %v377 = vmul.f32 %v374, %v371
    %379 = vrot.lane.b32.xlu0 %v377, 64
    %v380 = vpop.permute.xlu0 %379
    %v382 = vadd.f32 %v376, %v380
    %v383 = vtanh.pop %v382
    %v384 = vmul.f32 %v375, %v383
    %v386 = vsel %vm150, %v384, 0
    %388 = vmatpush.msra.mxu0 0.0
    %389 = vmatpush.msra.mxu0 0.0
    %390 = vmatpush.msra.mxu0 0.0
    %391 = vmatpush.msra.mxu0 0.0
    %392 = vmatpush.msra.mxu0 0.0
    %393 = vmatpush.msra.mxu0 0.0
    %394 = vmatpush.msra.mxu0 0.0
    %395 = vmatpush.msra.mxu0 0.0
    %396 = vmatpush.msra.mxu0 %v50
    %397 = vmatpush.msra.mxu0 %v48
    %398 = vmatpush.msra.mxu0 %v46
    %399 = vmatpush.msra.mxu0 %v44
    %400 = vmatpush.msra.mxu0 %v42
    %401 = vmatpush.msra.mxu0 %v40
    %402 = vmatpush.msra.mxu0 %v38
    %403 = vmatpush.msra.mxu0 %v36
    %404 = vmatmul.f32.gmra.mxu0 %v386
    %v405 = vpop.f32.mrf.mxu0
    %v406 = vadd.f32 %v136, %v405
    %407 = vdwg.mxu0
    %408 = vmatpush.msra.mxu0 0.0
    %409 = vmatpush.msra.mxu0 0.0
    %410 = vmatpush.msra.mxu0 0.0
    %411 = vmatpush.msra.mxu0 0.0
    %412 = vmatpush.msra.mxu0 0.0
    %413 = vmatpush.msra.mxu0 0.0
    %414 = vmatpush.msra.mxu0 0.0
    %415 = vmatpush.msra.mxu0 0.0
    %416 = vmatpush.msra.mxu0 %v51
    %417 = vmatpush.msra.mxu0 %v49
    %418 = vmatpush.msra.mxu0 %v47
    %419 = vmatpush.msra.mxu0 %v45
    %420 = vmatpush.msra.mxu0 %v43
    %421 = vmatpush.msra.mxu0 %v41
    %422 = vmatpush.msra.mxu0 %v39
    %423 = vmatpush.msra.mxu0 %v37
    %424 = vmatmul.f32.gmra.mxu0 %v386
    %v425 = vpop.f32.mrf.mxu0
    %v426 = vadd.f32 %v137, %v425
    %427 = vdwg.mxu0
    %v428 = vtanh.pop %v406
    %v429 = vtanh.pop %v426
    %v430 = vmul.f32 %v428, 0.5
    %v431 = vmul.f32 %v429, 0.5
    %v432 = vadd.f32 %v430, 0.5
    %v433 = vadd.f32 %v431, 0.5
    %v434 = vmul.f32 %v432, %v382
    %v435 = vmul.f32 %v432, %v429
    %437 = vrot.lane.b32.xlu0 %v435, 64
    %v438 = vpop.permute.xlu0 %437
    %v440 = vadd.f32 %v434, %v438
    %v441 = vtanh.pop %v440
    %v442 = vmul.f32 %v433, %v441
    %v444 = vsel %vm150, %v442, 0
    %446 = vmatpush.msra.mxu0 0.0
    %447 = vmatpush.msra.mxu0 0.0
    %448 = vmatpush.msra.mxu0 0.0
    %449 = vmatpush.msra.mxu0 0.0
    %450 = vmatpush.msra.mxu0 0.0
    %451 = vmatpush.msra.mxu0 0.0
    %452 = vmatpush.msra.mxu0 0.0
    %453 = vmatpush.msra.mxu0 0.0
    %454 = vmatpush.msra.mxu0 %v50
    %455 = vmatpush.msra.mxu0 %v48
    %456 = vmatpush.msra.mxu0 %v46
    %457 = vmatpush.msra.mxu0 %v44
    %458 = vmatpush.msra.mxu0 %v42
    %459 = vmatpush.msra.mxu0 %v40
    %460 = vmatpush.msra.mxu0 %v38
    %461 = vmatpush.msra.mxu0 %v36
    %462 = vmatmul.f32.gmra.mxu0 %v444
    %v463 = vpop.f32.mrf.mxu0
    %v464 = vadd.f32 %v138, %v463
    %465 = vdwg.mxu0
    %466 = vmatpush.msra.mxu0 0.0
    %467 = vmatpush.msra.mxu0 0.0
    %468 = vmatpush.msra.mxu0 0.0
    %469 = vmatpush.msra.mxu0 0.0
    %470 = vmatpush.msra.mxu0 0.0
    %471 = vmatpush.msra.mxu0 0.0
    %472 = vmatpush.msra.mxu0 0.0
    %473 = vmatpush.msra.mxu0 0.0
    %474 = vmatpush.msra.mxu0 %v51
    %475 = vmatpush.msra.mxu0 %v49
    %476 = vmatpush.msra.mxu0 %v47
    %477 = vmatpush.msra.mxu0 %v45
    %478 = vmatpush.msra.mxu0 %v43
    %479 = vmatpush.msra.mxu0 %v41
    %480 = vmatpush.msra.mxu0 %v39
    %481 = vmatpush.msra.mxu0 %v37
    %482 = vmatmul.f32.gmra.mxu0 %v444
    %v483 = vpop.f32.mrf.mxu0
    %v484 = vadd.f32 %v139, %v483
    %485 = vdwg.mxu0
    %v486 = vtanh.pop %v464
    %v487 = vtanh.pop %v484
    %v488 = vmul.f32 %v486, 0.5
    %v489 = vmul.f32 %v487, 0.5
    %v490 = vadd.f32 %v488, 0.5
    %v491 = vadd.f32 %v489, 0.5
    %v492 = vmul.f32 %v490, %v440
    %v493 = vmul.f32 %v490, %v487
    %495 = vrot.lane.b32.xlu0 %v493, 64
    %v496 = vpop.permute.xlu0 %495
    %v498 = vadd.f32 %v492, %v496
    %v499 = vtanh.pop %v498
    %v500 = vmul.f32 %v491, %v499
    %v502 = vsel %vm150, %v500, 0
    %504 = vmatpush.msra.mxu0 0.0
    %505 = vmatpush.msra.mxu0 0.0
    %506 = vmatpush.msra.mxu0 0.0
    %507 = vmatpush.msra.mxu0 0.0
    %508 = vmatpush.msra.mxu0 0.0
    %509 = vmatpush.msra.mxu0 0.0
    %510 = vmatpush.msra.mxu0 0.0
    %511 = vmatpush.msra.mxu0 0.0
    %512 = vmatpush.msra.mxu0 %v50
    %513 = vmatpush.msra.mxu0 %v48
    %514 = vmatpush.msra.mxu0 %v46
    %515 = vmatpush.msra.mxu0 %v44
    %516 = vmatpush.msra.mxu0 %v42
    %517 = vmatpush.msra.mxu0 %v40
    %518 = vmatpush.msra.mxu0 %v38
    %519 = vmatpush.msra.mxu0 %v36
    %520 = vmatmul.f32.gmra.mxu0 %v502
    %v521 = vpop.f32.mrf.mxu0
    %v522 = vadd.f32 %v140, %v521
    %523 = vdwg.mxu0
    %524 = vmatpush.msra.mxu0 0.0
    %525 = vmatpush.msra.mxu0 0.0
    %526 = vmatpush.msra.mxu0 0.0
    %527 = vmatpush.msra.mxu0 0.0
    %528 = vmatpush.msra.mxu0 0.0
    %529 = vmatpush.msra.mxu0 0.0
    %530 = vmatpush.msra.mxu0 0.0
    %531 = vmatpush.msra.mxu0 0.0
    %532 = vmatpush.msra.mxu0 %v51
    %533 = vmatpush.msra.mxu0 %v49
    %534 = vmatpush.msra.mxu0 %v47
    %535 = vmatpush.msra.mxu0 %v45
    %536 = vmatpush.msra.mxu0 %v43
    %537 = vmatpush.msra.mxu0 %v41
    %538 = vmatpush.msra.mxu0 %v39
    %539 = vmatpush.msra.mxu0 %v37
    %540 = vmatmul.f32.gmra.mxu0 %v502
    %v541 = vpop.f32.mrf.mxu0
    %v542 = vadd.f32 %v141, %v541
    %543 = vdwg.mxu0
    %v544 = vtanh.pop %v522
    %v545 = vtanh.pop %v542
    %v546 = vmul.f32 %v544, 0.5
    %v547 = vmul.f32 %v545, 0.5
    %v548 = vadd.f32 %v546, 0.5
    %v549 = vadd.f32 %v547, 0.5
    %v550 = vmul.f32 %v548, %v498
    %v551 = vmul.f32 %v548, %v545
    %553 = vrot.lane.b32.xlu0 %v551, 64
    %v554 = vpop.permute.xlu0 %553
    %v556 = vadd.f32 %v550, %v554
    %v557 = vtanh.pop %v556
    %v558 = vmul.f32 %v549, %v557
    %v560 = vsel %vm150, %v558, 0
    %562 = vmatpush.msra.mxu0 0.0
    %563 = vmatpush.msra.mxu0 0.0
    %564 = vmatpush.msra.mxu0 0.0
    %565 = vmatpush.msra.mxu0 0.0
    %566 = vmatpush.msra.mxu0 0.0
    %567 = vmatpush.msra.mxu0 0.0
    %568 = vmatpush.msra.mxu0 0.0
    %569 = vmatpush.msra.mxu0 0.0
    %570 = vmatpush.msra.mxu0 %v50
    %571 = vmatpush.msra.mxu0 %v48
    %572 = vmatpush.msra.mxu0 %v46
    %573 = vmatpush.msra.mxu0 %v44
    %574 = vmatpush.msra.mxu0 %v42
    %575 = vmatpush.msra.mxu0 %v40
    %576 = vmatpush.msra.mxu0 %v38
    %577 = vmatpush.msra.mxu0 %v36
    %578 = vmatmul.f32.gmra.mxu0 %v560
    %v579 = vpop.f32.mrf.mxu0
    %v580 = vadd.f32 %v142, %v579
    %581 = vdwg.mxu0
    %582 = vmatpush.msra.mxu0 0.0
    %583 = vmatpush.msra.mxu0 0.0
    %584 = vmatpush.msra.mxu0 0.0
    %585 = vmatpush.msra.mxu0 0.0
    %586 = vmatpush.msra.mxu0 0.0
    %587 = vmatpush.msra.mxu0 0.0
    %588 = vmatpush.msra.mxu0 0.0
    %589 = vmatpush.msra.mxu0 0.0
    %590 = vmatpush.msra.mxu0 %v51
    %591 = vmatpush.msra.mxu0 %v49
    %592 = vmatpush.msra.mxu0 %v47
    %593 = vmatpush.msra.mxu0 %v45
    %594 = vmatpush.msra.mxu0 %v43
    %595 = vmatpush.msra.mxu0 %v41
    %596 = vmatpush.msra.mxu0 %v39
    %597 = vmatpush.msra.mxu0 %v37
    %598 = vmatmul.f32.gmra.mxu0 %v560
    %v599 = vpop.f32.mrf.mxu0
    %v600 = vadd.f32 %v143, %v599
    %601 = vdwg.mxu0
    %v602 = vtanh.pop %v580
    %v603 = vtanh.pop %v600
    %v604 = vmul.f32 %v602, 0.5
    %v605 = vmul.f32 %v603, 0.5
    %v606 = vadd.f32 %v604, 0.5
    %v607 = vadd.f32 %v605, 0.5
    %v608 = vmul.f32 %v606, %v556
    %v609 = vmul.f32 %v606, %v603
    %611 = vrot.lane.b32.xlu0 %v609, 64
    %v612 = vpop.permute.xlu0 %611
    %v614 = vadd.f32 %v608, %v612
    %v615 = vtanh.pop %v614
    %v616 = vmul.f32 %v607, %v615
    %v618 = vsel %vm150, %v616, 0
    %620 = vmatpush.msra.mxu0 0.0
    %621 = vmatpush.msra.mxu0 0.0
    %622 = vmatpush.msra.mxu0 0.0
    %623 = vmatpush.msra.mxu0 0.0
    %624 = vmatpush.msra.mxu0 0.0
    %625 = vmatpush.msra.mxu0 0.0
    %626 = vmatpush.msra.mxu0 0.0
    %627 = vmatpush.msra.mxu0 0.0
    %628 = vmatpush.msra.mxu0 %v50
    %629 = vmatpush.msra.mxu0 %v48
    %630 = vmatpush.msra.mxu0 %v46
    %631 = vmatpush.msra.mxu0 %v44
    %632 = vmatpush.msra.mxu0 %v42
    %633 = vmatpush.msra.mxu0 %v40
    %634 = vmatpush.msra.mxu0 %v38
    %635 = vmatpush.msra.mxu0 %v36
    %636 = vmatmul.f32.gmra.mxu0 %v618
    %v637 = vpop.f32.mrf.mxu0
    %v638 = vadd.f32 %v124, %v637
    %639 = vdwg.mxu0
    %640 = vmatpush.msra.mxu0 0.0
    %641 = vmatpush.msra.mxu0 0.0
    %642 = vmatpush.msra.mxu0 0.0
    %643 = vmatpush.msra.mxu0 0.0
    %644 = vmatpush.msra.mxu0 0.0
    %645 = vmatpush.msra.mxu0 0.0
    %646 = vmatpush.msra.mxu0 0.0
    %647 = vmatpush.msra.mxu0 0.0
    %648 = vmatpush.msra.mxu0 %v51
    %649 = vmatpush.msra.mxu0 %v49
    %650 = vmatpush.msra.mxu0 %v47
    %651 = vmatpush.msra.mxu0 %v45
    %652 = vmatpush.msra.mxu0 %v43
    %653 = vmatpush.msra.mxu0 %v41
    %654 = vmatpush.msra.mxu0 %v39
    %655 = vmatpush.msra.mxu0 %v37
    %656 = vmatmul.f32.gmra.mxu0 %v618
    %v657 = vpop.f32.mrf.mxu0
    %v658 = vadd.f32 %v125, %v657
    %659 = vdwg.mxu0
    %v660 = vtanh.pop %v638
    %v661 = vtanh.pop %v658
    %v662 = vmul.f32 %v660, 0.5
    %v663 = vmul.f32 %v661, 0.5
    %v664 = vadd.f32 %v662, 0.5
    %v665 = vadd.f32 %v663, 0.5
    %v666 = vmul.f32 %v664, %v614
    %v667 = vmul.f32 %v664, %v661
    %669 = vrot.lane.b32.xlu0 %v667, 64
    %v670 = vpop.permute.xlu0 %669
    %v672 = vadd.f32 %v666, %v670
    %v673 = vtanh.pop %v672
    %v674 = vmul.f32 %v665, %v673
    %v675 = vsel %vm147, %v674, %v616
    %v676 = vsel %vm147, %v672, %v614
    %vm677 = vcmask 254976
    %678 = vst.msk [vmem:[#allocation3] sm:$0x3] %vm677, %v675
    %680 = vrot.lane.b32.xlu0 %v675, 96
    %v681 = vpop.permute.xlu0 %680
    %s683 = scalar_lea.vmem [#allocation3], 2
    %684 = vst.msk [vmem:[%s683] sm:$0x3] %vm677, %v681
    %685 = vst.msk [vmem:[#allocation5] sm:$0x3] %vm677, %v676
    %687 = vrot.lane.b32.xlu0 %v676, 96
    %v688 = vpop.permute.xlu0 %687
    %s690 = scalar_lea.vmem [#allocation5], 2
    %691 = vst.msk [vmem:[%s690] sm:$0x3] %vm677, %v688
    %v692 = vld [vmem:[%s6] sm:$0xff]
    %v693 = vld [vmem:[%s6 + $0x8] sm:$0xff]
    %v694 = vld [vmem:[%s6 + $0x10] sm:$0xff]
    %v695 = vld [vmem:[%s6 + $0x18] sm:$0xff]
    %v696 = vld [vmem:[#allocation2] sm:$0x1]
    %v698 = vperm.slane %v696, 0
    %vm700 = vcmask 261120
    %v701 = vsel %vm700, %v681, 0
    %703 = vmatpush.msra.mxu0 0.0
    %704 = vmatpush.msra.mxu0 0.0
    %705 = vmatpush.msra.mxu0 0.0
    %706 = vmatpush.msra.mxu0 0.0
    %707 = vmatpush.msra.mxu0 0.0
    %708 = vmatpush.msra.mxu0 0.0
    %709 = vmatpush.msra.mxu0 0.0
    %710 = vmatpush.msra.mxu0 0.0
    %711 = vmatpush.msra.mxu0 0.0
    %712 = vmatpush.msra.mxu0 0.0
    %713 = vmatpush.msra.mxu0 0.0
    %714 = vmatpush.msra.mxu0 0.0
    %715 = vmatpush.msra.mxu0 %v695
    %716 = vmatpush.msra.mxu0 %v694
    %717 = vmatpush.msra.mxu0 %v693
    %718 = vmatpush.msra.mxu0 %v692
    %719 = vmatmul.f32.gmra.mxu0 %v701
    %v720 = vpop.f32.mrf.mxu0
    %v721 = vadd.f32 %v698, %v720
    %722 = vdwg.mxu0
    %vm723 = vcmask 1024
    %724 = vst.msk [vmem:[%s8] sm:$0x3] %vm723, %v721
    // Predicated region
    $region34: #{lstm_predictor_forward.1} parent=1 // pred_check
      _
    $region35: #{lstm_predictor_forward.1} parent=1 // pred_check_branch
      %726 = sbr.rel (0) target = $region37
    $region36: #{lstm_predictor_forward.1} parent=1 // pred_region
      _
    $region37: #{lstm_predictor_forward.1} parent=1 // pred_fallthru
      _
    // Predicated region
    $region38: #{lstm_predictor_forward.1} parent=1 // pred_check
      _
    $region39: #{lstm_predictor_forward.1} parent=1 // pred_check_branch
      %728 = sbr.rel (0) target = $region41
    $region40: #{lstm_predictor_forward.1} parent=1 // pred_region
      %730 = vsyncadd [#allocation4], 0
      %s731 = sshll.u32 [#allocation3], 4
      %s732 = int_to_ptr.vmem [resolvable:$true] %s731
      %s733 = sshll.u32 %s9, 4
      %s734 = int_to_ptr.hbm [resolvable:$true] %s733
      %739 = dma.vmem_to_hbm [thread:$0]  %s732, 64, %s734, [#allocation4], 32, 32, 2
    $region41: #{lstm_predictor_forward.1} parent=1 // pred_fallthru
      _
    // Predicated region
    $region42: #{lstm_predictor_forward.1} parent=1 // pred_check
      _
    $region43: #{lstm_predictor_forward.1} parent=1 // pred_check_branch
      %741 = sbr.rel (0) target = $region45
    $region44: #{lstm_predictor_forward.1} parent=1 // pred_region
      %743 = vsyncadd [#allocation6], 0
      %s744 = sshll.u32 [#allocation5], 4
      %s745 = int_to_ptr.vmem [resolvable:$true] %s744
      %s746 = sshll.u32 %s10, 4
      %s747 = int_to_ptr.hbm [resolvable:$true] %s746
      %752 = dma.vmem_to_hbm [thread:$0]  %s745, 64, %s747, [#allocation6], 32, 32, 2
    $region45: #{lstm_predictor_forward.1} parent=1 // pred_fallthru
      _
    // Predicated region
    $region46: #{lstm_predictor_forward.1} parent=1 // pred_check
      _
    $region47: #{lstm_predictor_forward.1} parent=1 // pred_check_branch
      %754 = sbr.rel (0) target = $region49
    $region48: #{lstm_predictor_forward.1} parent=1 // pred_region
      _
    $region49: #{lstm_predictor_forward.1} parent=1 // pred_fallthru
      _
    // Predicated region
    $region50: #{lstm_predictor_forward.1} parent=1 // pred_check
      _
    $region51: #{lstm_predictor_forward.1} parent=1 // pred_check_branch
      %756 = sbr.rel (0) target = $region53
    $region52: #{lstm_predictor_forward.1} parent=1 // pred_region
      %758 = dma.done [#allocation4], 64
    $region53: #{lstm_predictor_forward.1} parent=1 // pred_fallthru
      _
    // Predicated region
    $region54: #{lstm_predictor_forward.1} parent=1 // pred_check
      _
    $region55: #{lstm_predictor_forward.1} parent=1 // pred_check_branch
      %760 = sbr.rel (0) target = $region57
    $region56: #{lstm_predictor_forward.1} parent=1 // pred_region
      %762 = dma.done [#allocation6], 64
    $region57: #{lstm_predictor_forward.1} parent=1 // pred_fallthru
      _
    %763 = vsyncpa [#allocation4], 1
    %764 = vsyncpa [#allocation6], 1

</llo_original>
